<compile_context>
chip_gen: v7x
topology: tpu7x:2x2x1
jax: 0.10.0
libtpu: 0.0.40
codegen_flags: <defaults>
</compile_context>

<pallas_src>
import math
import functools

import numpy as np
import jax
import jax.numpy as jnp
from jax.experimental import pallas as pl
from jax.experimental.pallas import tpu as pltpu


# ---------------------------------------------------------------------------
# DCT filter construction (matches CDCA_m.get_freq_indices1 / CDCA_layer).
# The module indexes (not slices) the frequency tables, so every dct layer has
# exactly ONE frequency and every channel gets the SAME (dct_h, dct_w) filter.
# ---------------------------------------------------------------------------
def _build_filter(pos, freq, POS):
    result = math.cos(math.pi * freq * (pos + 0.5) / POS) / math.sqrt(POS)
    if freq == 0:
        return result
    return result * math.sqrt(2)


def _get_freq_indices1(method):
    if 'low' in method:
        num_freq = int(method[3:])
        all_low_x = [0, 0, 1, 2, 1, 0, 0, 1, 2, 3, 4, 3, 2, 1, 0, 0, 1, 2, 3, 4, 5]
        all_low_y = [0, 1, 0, 0, 1, 2, 3, 2, 1, 0, 0, 1, 2, 3, 4, 5, 4, 3, 2, 1, 0]
        return [all_low_x[num_freq]], [all_low_y[num_freq]]
    elif '0' in method:
        return [0], [0]
    raise NotImplementedError(method)


def _dct_spatial_filter(method, dct_h, dct_w):
    mx, my = _get_freq_indices1(method)
    mx = [v * (dct_h // 8) for v in mx]
    my = [v * (dct_w // 8) for v in my]
    u, v = mx[0], my[0]
    f = np.zeros((dct_h, dct_w), dtype=np.float32)
    for tx in range(dct_h):
        for ty in range(dct_w):
            f[tx, ty] = _build_filter(tx, u, dct_h) * _build_filter(ty, v, dct_w)
    return jnp.asarray(f)


def _round_up(x, m):
    return (x + m - 1) // m * m


# ---------------------------------------------------------------------------
# Pallas kernel.  grid = (batch blocks [parallel], HW chunks [arbitrary]).
# ---------------------------------------------------------------------------
def _cdca_kernel(x_ref, pool_ref, w1_ref, w2t_ref, o_ref, sum_acc, max_acc,
                 *, nb, c, ch, npool, hwt):
    # x_ref   : (nb, C, HWT)   input block (NCHW flattened over spatial)
    # pool_ref: (HWT, NPOOL)   col 0 = 1/HW (avg pool); cols 1.. = DCT filters
    # w1_ref  : (CH, C)        fc1 weight
    # w2t_ref : (CH, C)        fc2 weight, pre-transposed
    # o_ref   : (1, nb, C)     sigmoid(channel attention) slab
    # sum_acc : (nb*C, NPOOL)  f32 scratch: sum-type pooling accumulators
    # max_acc : (nb*C, 1)      f32 scratch: running global max
    k = pl.program_id(1)
    nk = pl.num_programs(1)

    # Free leading-dim merge: HW stays the last (lane) dim.
    xb = x_ref[...].reshape(nb * c, hwt)                                   # (nb*C, HWT)

    # avg + 5 DCT-frequency poolings for ALL nb elements: one MXU matmul.
    psum = jnp.dot(xb, pool_ref[...], preferred_element_type=jnp.float32)  # (nb*C, NPOOL)
    # global max pooling: one lane reduction over the whole slab.
    pmax = jnp.max(xb, axis=1, keepdims=True)                              # (nb*C, 1)

    @pl.when(k == 0)
    def _():
        sum_acc[...] = psum
        max_acc[...] = pmax

    @pl.when(k > 0)
    def _():
        sum_acc[...] = sum_acc[...] + psum
        max_acc[...] = jnp.maximum(max_acc[...], pmax)

    @pl.when(k == nk - 1)
    def _():
        w1 = w1_ref[...]                                                   # (CH, C)
        sums = sum_acc[...].reshape(nb, c, npool)                          # (nb, C, NPOOL)
        mx = max_acc[...].reshape(nb, c)                                   # (nb, C)

        # Shared SE bottleneck.  fc1/fc2 are bias-free 1x1 convs, so
        #   sum_d fc2(relu(fc1(desc_d))) == fc2( sum_d relu(fc1(desc_d)) ).
        # fc1 over the 6 sum-type descriptors: one batched matmul over nb.
        w1b = jnp.broadcast_to(w1[None, :, :], (nb, ch, c))
        h_sum = jnp.einsum('boc,bcp->bop', w1b, sums,
                           preferred_element_type=jnp.float32)             # (nb, CH, NPOOL)
        h = jnp.sum(jnp.maximum(h_sum, 0.0), axis=2)                       # (nb, CH)
        # fc1 over the max descriptor: plain "NT" matmul (no lane concat).
        h_max = jnp.einsum('bc,oc->bo', mx, w1,
                           preferred_element_type=jnp.float32)             # (nb, CH)
        h = h + jnp.maximum(h_max, 0.0)

        # fc2 once for the whole block, one sigmoid, one dense slab store.
        rows = jnp.dot(h, w2t_ref[...], preferred_element_type=jnp.float32)  # (nb, C)
        o_ref[0] = jax.nn.sigmoid(rows)


def cdca_forward(x, dct_filters, w1, w2, dct_h=8, dct_w=8):
    """x: (N, C, H, W) f32; dct_filters: list of (dct_h, dct_w) channel-uniform
    spatial filters; w1: (C//16, C) fc1 weight; w2: (C, C//16) fc2 weight."""
    n, c, h, w = x.shape
    hw = h * w
    ch = w1.shape[0]

    # Fold adaptive_avg_pool2d((dct_h, dct_w)) into the DCT spatial vectors.
    # TODO(synk): non-evenly-divisible adaptive_avg_pool2d windows not handled.
    assert h % dct_h == 0 and w % dct_w == 0
    kh, kw = h // dct_h, w // dct_w

    cols = [jnp.full((hw,), 1.0 / hw, dtype=jnp.float32)]                  # avg pool
    for f in dct_filters:
        e = jnp.repeat(jnp.repeat(f.astype(jnp.float32), kh, axis=0), kw, axis=1)
        cols.append(e.reshape(hw) / float(kh * kw))
    pool = jnp.stack(cols, axis=1)                                         # (HW, NPOOL)
    npool = pool.shape[1]

    x_flat = x.reshape(n, c, hw).astype(jnp.float32)
    # TODO(synk): optionally stream x/pool as bf16 (f32 MXU accumulate) for ~2x
    #             on bandwidth-bound shapes; kept f32 to preserve tolerances.
    w1f = w1.astype(jnp.float32)                                           # (CH, C)
    w2t = jnp.transpose(w2.astype(jnp.float32))                            # (CH, C)

    # ---- generation-aware VMEM budget --------------------------------------
    try:
        vmem_cap = int(pltpu.get_tpu_info().vmem_capacity_bytes)
    except Exception:
        vmem_cap = 64 << 20                                                # conservative (v7x)
    budget = min(max(32 << 20, int(vmem_cap * 0.65)), 96 << 20)

    w_bytes = 2 * _round_up(ch, 8) * _round_up(c, 128) * 4                 # w1 + w2t, per buffer
    blk_elem_full = _round_up(c, 8) * _round_up(hw, 128) * 4
    pool_full = _round_up(hw, 8) * _round_up(npool, 128) * 4
    fixed0 = 2 * pool_full + 2 * w_bytes

    # ---- spatial (HW) reduction tiling for large C*HW ----------------------
    hwt = hw
    if 2 * blk_elem_full + fixed0 > budget and hw > 128:
        per_row = _round_up(c, 8) * 4
        max_hwt = max(128, ((budget // 6) // per_row) // 128 * 128)
        best = None
        t = 128
        while t <= min(hw, max_hwt):
            if hw % t == 0:
                best = t
            t += 128
        if best is not None:
            hwt = best
        # TODO(synk): hw with no multiple-of-128 divisor falls back to a
        #             full-spatial block and may still exceed the VMEM budget.
    kt = hw // hwt

    blk_elem = _round_up(c, 8) * _round_up(hwt, 128) * 4
    pool_blk = _round_up(hwt, 8) * _round_up(npool, 128) * 4
    fixed = 2 * pool_blk + 2 * w_bytes

    # ---- batch block size: big DMAs, but keep >= 4 grid steps when possible
    # ---- (>= 2 pipelined steps per TensorCore on dual-TC parts).
    cap = max(1, (budget - fixed) // (2 * blk_elem))
    if n >= 4:
        cap = min(cap, n // 4)
    elif n >= 2:
        cap = min(cap, n // 2)
    nb = int(max(1, min(cap, n)))
    grid_n = int(pl.cdiv(n, nb))
    n_pad = grid_n * nb
    if n_pad != n:
        x_flat = jnp.pad(x_flat, ((0, n_pad - n), (0, 0), (0, 0)))

    out_blk = _round_up(nb, 8) * _round_up(c, 128) * 4
    scratch_bytes = _round_up(nb * c, 8) * (_round_up(npool, 128) + 128) * 4
    need = 2 * nb * blk_elem + fixed + 2 * out_blk + scratch_bytes
    vmem_limit = int(max(16 << 20, min(need + (8 << 20), int(vmem_cap * 0.85))))

    flops = 2 * n_pad * c * hw * npool + 2 * n_pad * c * ch * (npool + 2)
    bytes_accessed = (n_pad * c * hw + hw * npool + 2 * ch * c + n_pad * c) * 4
    cost = pl.CostEstimate(flops=flops, transcendentals=n_pad * c,
                           bytes_accessed=bytes_accessed)

    kern = functools.partial(_cdca_kernel, nb=nb, c=c, ch=ch, npool=npool, hwt=hwt)
    out = pl.pallas_call(
        kern,
        out_shape=jax.ShapeDtypeStruct((grid_n, nb, c), jnp.float32),
        grid_spec=pltpu.PrefetchScalarGridSpec(
            num_scalar_prefetch=0,
            grid=(grid_n, kt),
            in_specs=[
                pl.BlockSpec((nb, c, hwt), lambda i, k: (i, 0, k)),
                pl.BlockSpec((hwt, npool), lambda i, k: (k, 0)),
                pl.BlockSpec((ch, c), lambda i, k: (0, 0)),
                pl.BlockSpec((ch, c), lambda i, k: (0, 0)),
            ],
            out_specs=pl.BlockSpec((1, nb, c), lambda i, k: (i, 0, 0)),
            scratch_shapes=[
                pltpu.VMEM((nb * c, npool), jnp.float32),
                pltpu.VMEM((nb * c, 1), jnp.float32),
            ],
        ),
        compiler_params=pltpu.CompilerParams(
            dimension_semantics=("parallel", "arbitrary"),
            vmem_limit_bytes=vmem_limit,
        ),
        cost_estimate=cost,
    )(x_flat, pool, w1f, w2t)

    return out.reshape(n_pad, c)[:n].reshape(n, c, 1, 1)


# ---------------------------------------------------------------------------
# Pure-JAX reference (mirrors the PyTorch forward) for a correctness check.
# ---------------------------------------------------------------------------
def cdca_reference(x, dct_filters, w1, w2, dct_h=8, dct_w=8):
    n, c, h, w_ = x.shape
    if h != dct_h or w_ != dct_w:
        kh, kw = h // dct_h, w_ // dct_w
        x_pooled = x.reshape(n, c, dct_h, kh, dct_w, kw).mean(axis=(3, 5))
    else:
        x_pooled = x

    hp = jax.lax.Precision.HIGHEST

    def se(v):  # v: (n, c)
        hid = jnp.maximum(jnp.einsum('oc,nc->no', w1, v, precision=hp), 0.0)
        return jnp.einsum('co,no->nc', w2, hid, precision=hp)

    out = se(x.mean(axis=(2, 3))) + se(x.max(axis=(2, 3)))
    for f in dct_filters:
        out = out + se((x_pooled * f[None, None]).sum(axis=(2, 3)))
    return jax.nn.sigmoid(out).reshape(n, c, 1, 1)


if __name__ == "__main__":
    N, C, H, W = 8, 32, 16, 16
    DCT_H = DCT_W = 8
    CH = C // 16                              # fc1 output channels (hard-coded //16)
    methods = ('low20', 'low18', 'low6', 'low7', 'low8')   # module defaults (E=True)
    dct_filters = [_dct_spatial_filter(m, DCT_H, DCT_W) for m in methods]

    key = jax.random.PRNGKey(0)
    kx, k1, k2 = jax.random.split(key, 3)
    x = jax.random.normal(kx, (N, C, H, W), dtype=jnp.float32)
    w1 = jax.random.normal(k1, (CH, C), dtype=jnp.float32) * (1.0 / math.sqrt(C))
    w2 = jax.random.normal(k2, (C, CH), dtype=jnp.float32) * (1.0 / math.sqrt(CH))

    out = cdca_forward(x, dct_filters, w1, w2, DCT_H, DCT_W)
    out = jax.block_until_ready(out)

    ref = cdca_reference(x, dct_filters, w1, w2, DCT_H, DCT_W)
    assert out.shape == (N, C, 1, 1)
    np.testing.assert_allclose(np.asarray(out), np.asarray(ref), atol=5e-3, rtol=5e-3)

    print("KERNEL_OK")
</pallas_src>

<mosaic_0001>
module attributes {stable_mosaic.version = 11 : i64} {
  func.func @_cdca_kernel(%arg0: i32, %arg1: i32, %arg2: memref<2x32x256xf32, #tpu.memory_space<vmem>>, %arg3: memref<256x6xf32, #tpu.memory_space<vmem>>, %arg4: memref<2x32xf32, #tpu.memory_space<vmem>>, %arg5: memref<2x32xf32, #tpu.memory_space<vmem>>, %arg6: memref<1x2x32xf32, #tpu.memory_space<vmem>>, %arg7: memref<64x6xf32, #tpu.memory_space<vmem>>, %arg8: memref<64x1xf32, #tpu.memory_space<vmem>>) attributes {dimension_semantics = [#tpu.dimension_semantics<parallel>, #tpu.dimension_semantics<arbitrary>], iteration_bounds = array<i64: 4, 1>, scalar_prefetch = 0 : i64, scratch_operands = 2 : i64, tpu.core_type = #tpu.core_type<tc>, window_params = [{transform_indices = @transform_0, window_bounds = array<i64: 2, 32, 256>}, {transform_indices = @transform_1, window_bounds = array<i64: 256, 6>}, {pipeline_mode = #tpu.pipeline_mode<synchronous>, transform_indices = @transform_2, window_bounds = array<i64: 2, 32>}, {pipeline_mode = #tpu.pipeline_mode<synchronous>, transform_indices = @transform_3, window_bounds = array<i64: 2, 32>}, {transform_indices = @transform_4, window_bounds = array<i64: 1, 2, 32>}]} {
    %c0 = arith.constant 0 : index
    %c0_0 = arith.constant 0 : index
    %c0_1 = arith.constant 0 : index
    %0 = vector.load %arg2[%c0, %c0_0, %c0_1] : memref<2x32x256xf32, #tpu.memory_space<vmem>>, vector<2x32x256xf32>
    %1 = vector.shape_cast %0 : vector<2x32x256xf32> to vector<64x256xf32>
    %c0_2 = arith.constant 0 : index
    %c0_3 = arith.constant 0 : index
    %2 = vector.load %arg3[%c0_2, %c0_3] : memref<256x6xf32, #tpu.memory_space<vmem>>, vector<256x6xf32>
    %cst = arith.constant dense<0.000000e+00> : vector<64x6xf32>
    %3 = tpu.matmul %1, %2, %cst {dimension_numbers = #tpu.dot_dimension_numbers<[1], [0], [0], [1], [0, 0, 1, 1], [], []>} : vector<64x256xf32>, vector<256x6xf32>, vector<64x6xf32> -> vector<64x6xf32>
    %cst_4 = arith.constant dense<0xFF800000> : vector<64xf32>
    %4 = vector.multi_reduction <maximumf>, %1, %cst_4 [1] : vector<64x256xf32> to vector<64xf32>
    %5 = vector.shape_cast %4 : vector<64xf32> to vector<64x1xf32>
    %c0_i32 = arith.constant 0 : i32
    %6 = arith.cmpi eq, %arg1, %c0_i32 : i32
    %7 = arith.extui %6 : i1 to i32
    %c0_i32_5 = arith.constant 0 : i32
    %8 = arith.cmpi ne, %7, %c0_i32_5 : i32
    scf.if %8 {
      %c0_10 = arith.constant 0 : index
      %c0_11 = arith.constant 0 : index
      %15 = vector.load %arg7[%c0_10, %c0_11] : memref<64x6xf32, #tpu.memory_space<vmem>>, vector<64x6xf32>
      tpu.vector_store %arg7[%c0_10, %c0_11], %3 {strides = array<i32>} : memref<64x6xf32, #tpu.memory_space<vmem>>, vector<64x6xf32>,
      %c0_12 = arith.constant 0 : index
      %c0_13 = arith.constant 0 : index
      %16 = vector.load %arg8[%c0_12, %c0_13] : memref<64x1xf32, #tpu.memory_space<vmem>>, vector<64x1xf32>
      tpu.vector_store %arg8[%c0_12, %c0_13], %5 {strides = array<i32>} : memref<64x1xf32, #tpu.memory_space<vmem>>, vector<64x1xf32>,
    } else {
    }
    %c0_i32_6 = arith.constant 0 : i32
    %9 = arith.cmpi sgt, %arg1, %c0_i32_6 : i32
    %10 = arith.extui %9 : i1 to i32
    %c0_i32_7 = arith.constant 0 : i32
    %11 = arith.cmpi ne, %10, %c0_i32_7 : i32
    scf.if %11 {
      %c0_10 = arith.constant 0 : index
      %c0_11 = arith.constant 0 : index
      %15 = vector.load %arg7[%c0_10, %c0_11] : memref<64x6xf32, #tpu.memory_space<vmem>>, vector<64x6xf32>
      %16 = arith.addf %15, %3 : vector<64x6xf32>
      %c0_12 = arith.constant 0 : index
      %c0_13 = arith.constant 0 : index
      %17 = vector.load %arg7[%c0_12, %c0_13] : memref<64x6xf32, #tpu.memory_space<vmem>>, vector<64x6xf32>
      tpu.vector_store %arg7[%c0_12, %c0_13], %16 {strides = array<i32>} : memref<64x6xf32, #tpu.memory_space<vmem>>, vector<64x6xf32>,
      %c0_14 = arith.constant 0 : index
      %c0_15 = arith.constant 0 : index
      %18 = vector.load %arg8[%c0_14, %c0_15] : memref<64x1xf32, #tpu.memory_space<vmem>>, vector<64x1xf32>
      %19 = arith.maximumf %18, %5 : vector<64x1xf32>
      %c0_16 = arith.constant 0 : index
      %c0_17 = arith.constant 0 : index
      %20 = vector.load %arg8[%c0_16, %c0_17] : memref<64x1xf32, #tpu.memory_space<vmem>>, vector<64x1xf32>
      tpu.vector_store %arg8[%c0_16, %c0_17], %19 {strides = array<i32>} : memref<64x1xf32, #tpu.memory_space<vmem>>, vector<64x1xf32>,
    } else {
    }
    %c0_i32_8 = arith.constant 0 : i32
    %12 = arith.cmpi eq, %arg1, %c0_i32_8 : i32
    %13 = arith.extui %12 : i1 to i32
    %c0_i32_9 = arith.constant 0 : i32
    %14 = arith.cmpi ne, %13, %c0_i32_9 : i32
    scf.if %14 {
      %c0_10 = arith.constant 0 : index
      %c0_11 = arith.constant 0 : index
      %15 = vector.load %arg4[%c0_10, %c0_11] : memref<2x32xf32, #tpu.memory_space<vmem>>, vector<2x32xf32>
      %c0_12 = arith.constant 0 : index
      %c0_13 = arith.constant 0 : index
      %16 = vector.load %arg7[%c0_12, %c0_13] : memref<64x6xf32, #tpu.memory_space<vmem>>, vector<64x6xf32>
      %17 = vector.shape_cast %16 : vector<64x6xf32> to vector<2x32x6xf32>
      %c0_14 = arith.constant 0 : index
      %c0_15 = arith.constant 0 : index
      %18 = vector.load %arg8[%c0_14, %c0_15] : memref<64x1xf32, #tpu.memory_space<vmem>>, vector<64x1xf32>
      %19 = vector.shape_cast %18 : vector<64x1xf32> to vector<2x32xf32>
      %20 = vector.shape_cast %15 : vector<2x32xf32> to vector<1x2x32xf32>
      %21 = vector.shape_cast %20 : vector<1x2x32xf32> to vector<1x2x32xf32>
      %22 = vector.broadcast %21 : vector<1x2x32xf32> to vector<2x2x32xf32>
      "tpu.trace_start"() <{level = 10 : i32, message = "boc,bcp->bop"}> : () -> ()
      %cst_16 = arith.constant dense<0.000000e+00> : vector<2x2x6xf32>
      %23 = tpu.matmul %22, %17, %cst_16 {dimension_numbers = #tpu.dot_dimension_numbers<[2], [1], [1], [2], [0, 0, 0, 1, 1, 2], [0], [0]>} : vector<2x2x32xf32>, vector<2x32x6xf32>, vector<2x2x6xf32> -> vector<2x2x6xf32>
      "tpu.trace_stop"() : () -> ()
      %cst_17 = arith.constant 0.000000e+00 : f32
      %24 = vector.broadcast %cst_17 : f32 to vector<2x2x6xf32>
      %25 = arith.maximumf %23, %24 : vector<2x2x6xf32>
      %cst_18 = arith.constant dense<0.000000e+00> : vector<2x2xf32>
      %26 = vector.multi_reduction <add>, %25, %cst_18 [2] : vector<2x2x6xf32> to vector<2x2xf32>
      "tpu.trace_start"() <{level = 10 : i32, message = "bc,oc->bo"}> : () -> ()
      %cst_19 = arith.constant dense<0.000000e+00> : vector<2x2xf32>
      %27 = tpu.matmul %19, %15, %cst_19 {dimension_numbers = #tpu.dot_dimension_numbers<[1], [1], [0], [0], [0, 0, 1, 0], [], []>} : vector<2x32xf32>, vector<2x32xf32>, vector<2x2xf32> -> vector<2x2xf32>
      "tpu.trace_stop"() : () -> ()
      %cst_20 = arith.constant 0.000000e+00 : f32
      %28 = vector.broadcast %cst_20 : f32 to vector<2x2xf32>
      %29 = arith.maximumf %27, %28 : vector<2x2xf32>
      %30 = arith.addf %26, %29 : vector<2x2xf32>
      %c0_21 = arith.constant 0 : index
      %c0_22 = arith.constant 0 : index
      %31 = vector.load %arg5[%c0_21, %c0_22] : memref<2x32xf32, #tpu.memory_space<vmem>>, vector<2x32xf32>
      %cst_23 = arith.constant dense<0.000000e+00> : vector<2x32xf32>
      %32 = tpu.matmul %30, %31, %cst_23 {dimension_numbers = #tpu.dot_dimension_numbers<[1], [0], [0], [1], [0, 0, 1, 1], [], []>} : vector<2x2xf32>, vector<2x32xf32>, vector<2x32xf32> -> vector<2x32xf32>
      %33 = arith.negf %32 : vector<2x32xf32>
      %34 = math.exp %33 : vector<2x32xf32>
      %cst_24 = arith.constant 1.000000e+00 : f32
      %35 = vector.broadcast %cst_24 : f32 to vector<2x32xf32>
      %36 = arith.addf %35, %34 : vector<2x32xf32>
      %37 = arith.divf %35, %36 : vector<2x32xf32>
      %c0_25 = arith.constant 0 : index
      %c0_26 = arith.constant 0 : index
      %c0_27 = arith.constant 0 : index
      %38 = vector.load %arg6[%c0_25, %c0_26, %c0_27] : memref<1x2x32xf32, #tpu.memory_space<vmem>>, vector<1x2x32xf32>
      %39 = vector.shape_cast %38 : vector<1x2x32xf32> to vector<2x32xf32>
      %40 = vector.shape_cast %37 : vector<2x32xf32> to vector<1x2x32xf32>
      tpu.vector_store %arg6[%c0_25, %c0_26, %c0_27], %40 {strides = array<i32>} : memref<1x2x32xf32, #tpu.memory_space<vmem>>, vector<1x2x32xf32>,
    } else {
    }
    return
  }
  func.func @transform_0(%arg0: i32, %arg1: i32) -> (i32, i32, i32) {
    %c0_i32 = arith.constant 0 : i32
    %c0_i32_0 = arith.constant 0 : i32
    return %arg0, %c0_i32, %arg1 : i32, i32, i32
  }
  func.func @transform_1(%arg0: i32, %arg1: i32) -> (i32, i32) {
    %c0_i32 = arith.constant 0 : i32
    %c0_i32_0 = arith.constant 0 : i32
    return %arg1, %c0_i32 : i32, i32
  }
  func.func @transform_2(%arg0: i32, %arg1: i32) -> (i32, i32) {
    %c0_i32 = arith.constant 0 : i32
    %c0_i32_0 = arith.constant 0 : i32
    %c0_i32_1 = arith.constant 0 : i32
    return %c0_i32, %c0_i32_0 : i32, i32
  }
  func.func @transform_3(%arg0: i32, %arg1: i32) -> (i32, i32) {
    %c0_i32 = arith.constant 0 : i32
    %c0_i32_0 = arith.constant 0 : i32
    %c0_i32_1 = arith.constant 0 : i32
    return %c0_i32, %c0_i32_0 : i32, i32
  }
  func.func @transform_4(%arg0: i32, %arg1: i32) -> (i32, i32, i32) {
    %c0_i32 = arith.constant 0 : i32
    %c0_i32_0 = arith.constant 0 : i32
    %c0_i32_1 = arith.constant 0 : i32
    return %arg0, %c0_i32, %c0_i32_0 : i32, i32, i32
  }
}

</mosaic_0001>

<llo_original>
// kernel: tpu_custom_call.1
$region0: #{tpu_custom_call.1}
  #allocation0 [shape = 'u32[]', space=smem, size = 0x4, offset = 0x4, fixed_abs, tag = 'smem constant byte address 0x4 - core index']
  #allocation1 [shape = 'u32[144,128]{1,0:T(1,128)}', space=vmem, size = 0x12000, scoped, tag = 'internal scratch']
  #allocation2 [shape = 'f32[64,6]{1,0:T(8,128)}', space=vmem, size = 0x8000, scoped, tag = 'scratch operand']
  #allocation3 [shape = 'f32[64,1]{1,0:T(8,128)}', space=vmem, size = 0x8000, scoped, tag = 'scratch operand']
  %s0 = inlined_call_operand.hbm [shape: f32[8,32,256], index: 0, kind: input, shape index: {}]
  %s1 = inlined_call_operand.vmem [shape: f32[256,6], index: 1, kind: input, shape index: {}]
  %s2 = inlined_call_operand.vmem [shape: f32[2,32], index: 2, kind: input, shape index: {}]
  %s3 = inlined_call_operand.vmem [shape: f32[2,32], index: 3, kind: input, shape index: {}]
  %s4 = inlined_call_operand.hbm [shape: f32[4,2,32], index: 4, kind: output, shape index: {}]
  %s5 = sld [smem:[#allocation0]]
  $region65: #{tpu_custom_call.1} parent=0
    _
  %s7 = ssub.s32 1, %s5
  %s8 = scalar_select 0, %s7, %s5
  $region1: #{tpu_custom_call.1} parent=0
    #allocation4 [shape = 'u8[131072]{0}', space=vmem, size = 0x20000, scoped, tag = 'input window, operand 0']
    #allocation5 [shape = 's32[2]{0}', space=sflag, size = 0x8, scoped, tag = 'scoped memory for tpu_custom_call.1']
    #allocation6 [shape = 's32[2]{0}', space=sflag, size = 0x8, scoped, tag = 'scoped memory for tpu_custom_call.1']
    #allocation7 [shape = 'u8[2048]{0}', space=vmem, size = 0x800, scoped, tag = 'output window, operand 0']
    %9 = vsyncpa [#allocation5], 0
    %s10 = scalar_lea.sflag [#allocation5], 1
    %11 = vsyncpa %s10, 0
    %12 = vsyncpa [#allocation6], 0
    %s13 = scalar_lea.sflag [#allocation6], 1
    %14 = vsyncpa %s13, 0
    loop: start=0, step=1, limit=6
    $region2: #{tpu_custom_call.1} parent=1 // loop_pre_header
      _
    $region3: #{tpu_custom_call.1} parent=1 // loop_header
      %s16 = sphi 0, %s20
      %p17 = scmp.ge.s32.totalorder %s16, 6
      %s23 = sphi 0, %s35
      %s24 = sphi 0, %s31
      %s25 = sphi 0, %s23
      %s26 = sphi 0, %s24
      %s27 = sphi 0, %s25
      %s28 = sphi 0, %s26
      %s40 = sphi 0, %s42
      %s43 = sphi 0, %s40
      %s44 = sphi 0, %s43
      %s60 = sphi 0, %s44
      %s66 = sphi 0, %s68
      %s69 = sphi 0, %s66
      %s70 = sphi 0, %s69
      %s86 = sphi 0, %s70
      %s90 = sphi 0, %s90
      %s92 = sphi 0, %s90
      %s93 = sphi 0, %s92
      %s107 = sphi 0, %s93
      %s111 = sphi 0, %s111
      %s113 = sphi 0, %s111
      %s114 = sphi 0, %s113
      %s128 = sphi 0, %s114
      %s134 = sphi 0, %s136
      %s137 = sphi 0, %s134
      %s138 = sphi 0, %s137
      %s154 = sphi 0, %s138
    $region4: #{tpu_custom_call.1} parent=1 // loop_header_branch
      %19 = sbr.rel (%p17) target = $region8
    $region5: #{tpu_custom_call.1} parent=1 // loop_body
      %s21 = ssub.s32 %s16, 1
      %s22 = ssub.s32 %s16, 2
      %s29 = sadd.s32 1, %s24
      %p30 = scmp.ge.s32.totalorder %s29, 1
      %s31 = scalar_select %p30, 0, %s29
      %s32 = sadd.s32 1, %s23
      %s33 = scalar_select %p30, %s32, %s23
      %p34 = scmp.ge.s32.totalorder %s33, 4
      %s35 = scalar_select %p34, 0, %s33
      %s36 = ssub.s32 %s23, %s35
      %s37 = ssub.s32 %s24, %s31
      %s38 = sor.u32 %s36, %s37
      %p39 = scmp.eq.s32.totalorder %s38, 0
      %s41 = sadd.s32 %s40, 1
      %s42 = scalar_select %p39, %s40, %s41
      %p45 = pneg %p39
      %p46 = scmp.eq.s32.totalorder %s16, 3
      %p47 = por %p45, %p46
      %p48 = scmp.ne.s32.totalorder %s40, %s43
      %p49 = scmp.eq.s32.totalorder %s16, 0
      %p50 = por %p48, %p49
      %p51 = scmp.ne.s32.totalorder %s40, %s43
      %p52 = scmp.eq.s32.totalorder %s21, 3
      %p53 = por %p51, %p52
      %p54 = scmp.ne.s32.totalorder %s43, %s44
      %p55 = scmp.eq.s32.totalorder %s21, 0
      %p56 = por %p54, %p55
      %p57 = scmp.ne.s32.totalorder %s43, %s44
      %p58 = scmp.eq.s32.totalorder %s22, 3
      %p59 = por %p57, %p58
      %p61 = scmp.ne.s32.totalorder %s44, %s60
      %p62 = scmp.eq.s32.totalorder %s22, 0
      %p63 = por %p61, %p62
      %s64 = ssub.s32 %s24, %s31
      %p65 = scmp.eq.s32.totalorder %s64, 0
      %s67 = sadd.s32 %s66, 1
      %s68 = scalar_select %p65, %s66, %s67
      %p71 = pneg %p65
      %p72 = scmp.eq.s32.totalorder %s16, 3
      %p73 = por %p71, %p72
      %p74 = scmp.ne.s32.totalorder %s66, %s69
      %p75 = scmp.eq.s32.totalorder %s16, 0
      %p76 = por %p74, %p75
      %p77 = scmp.ne.s32.totalorder %s66, %s69
      %p78 = scmp.eq.s32.totalorder %s21, 3
      %p79 = por %p77, %p78
      %p80 = scmp.ne.s32.totalorder %s69, %s70
      %p81 = scmp.eq.s32.totalorder %s21, 0
      %p82 = por %p80, %p81
      %p83 = scmp.ne.s32.totalorder %s69, %s70
      %p84 = scmp.eq.s32.totalorder %s22, 3
      %p85 = por %p83, %p84
      %p87 = scmp.ne.s32.totalorder %s70, %s86
      %p88 = scmp.eq.s32.totalorder %s22, 0
      %p89 = por %p87, %p88
      %s91 = sadd.s32 %s90, 1
      %p94 = scmp.eq.s32.totalorder %s16, 3
      %p95 = scmp.ne.s32.totalorder %s90, %s92
      %p96 = scmp.eq.s32.totalorder %s16, 0
      %p97 = por %p95, %p96
      %p98 = scmp.ne.s32.totalorder %s90, %s92
      %p99 = scmp.eq.s32.totalorder %s21, 3
      %p100 = por %p98, %p99
      %p101 = scmp.ne.s32.totalorder %s92, %s93
      %p102 = scmp.eq.s32.totalorder %s21, 0
      %p103 = por %p101, %p102
      %p104 = scmp.ne.s32.totalorder %s92, %s93
      %p105 = scmp.eq.s32.totalorder %s22, 3
      %p106 = por %p104, %p105
      %p108 = scmp.ne.s32.totalorder %s93, %s107
      %p109 = scmp.eq.s32.totalorder %s22, 0
      %p110 = por %p108, %p109
      %s112 = sadd.s32 %s111, 1
      %p115 = scmp.eq.s32.totalorder %s16, 3
      %p116 = scmp.ne.s32.totalorder %s111, %s113
      %p117 = scmp.eq.s32.totalorder %s16, 0
      %p118 = por %p116, %p117
      %p119 = scmp.ne.s32.totalorder %s111, %s113
      %p120 = scmp.eq.s32.totalorder %s21, 3
      %p121 = por %p119, %p120
      %p122 = scmp.ne.s32.totalorder %s113, %s114
      %p123 = scmp.eq.s32.totalorder %s21, 0
      %p124 = por %p122, %p123
      %p125 = scmp.ne.s32.totalorder %s113, %s114
      %p126 = scmp.eq.s32.totalorder %s22, 3
      %p127 = por %p125, %p126
      %p129 = scmp.ne.s32.totalorder %s114, %s128
      %p130 = scmp.eq.s32.totalorder %s22, 0
      %p131 = por %p129, %p130
      %s132 = ssub.s32 %s23, %s35
      %p133 = scmp.eq.s32.totalorder %s132, 0
      %s135 = sadd.s32 %s134, 1
      %s136 = scalar_select %p133, %s134, %s135
      %p139 = pneg %p133
      %p140 = scmp.eq.s32.totalorder %s16, 3
      %p141 = por %p139, %p140
      %p142 = scmp.ne.s32.totalorder %s134, %s137
      %p143 = scmp.eq.s32.totalorder %s16, 0
      %p144 = por %p142, %p143
      %p145 = scmp.ne.s32.totalorder %s134, %s137
      %p146 = scmp.eq.s32.totalorder %s21, 3
      %p147 = por %p145, %p146
      %p148 = scmp.ne.s32.totalorder %s137, %s138
      %p149 = scmp.eq.s32.totalorder %s21, 0
      %p150 = por %p148, %p149
      %p151 = scmp.ne.s32.totalorder %s137, %s138
      %p152 = scmp.eq.s32.totalorder %s22, 3
      %p153 = por %p151, %p152
      %p155 = scmp.ne.s32.totalorder %s138, %s154
      %p156 = scmp.eq.s32.totalorder %s22, 0
      %p157 = por %p155, %p156
      %p158 = scmp.le.s32.totalorder 1, %s16
      %p159 = scmp.lt.s32.totalorder %s16, 5
      %p160 = pnand %p158, %p159
      %p161 = pneg %p160
      // Predicated region
      $region9: #{tpu_custom_call.1} parent=5 // pred_check
        _
      $region10: #{tpu_custom_call.1} parent=5 // pred_check_branch
        %163 = sbr.rel (%p160) target = $region12
      $region11: #{tpu_custom_call.1} parent=5 // pred_region
        %s164 = ssub.s32 %s16, 1
        // Predicated region
        $region13: #{tpu_custom_call.1} parent=11 // pred_check
          %p165 = pneg %p82
        $region14: #{tpu_custom_call.1} parent=11 // pred_check_branch
          %167 = sbr.rel (%p165) target = $region16
        $region15: #{tpu_custom_call.1} parent=11 // pred_region
          %s168 = smul.u32 32, %s26
          %p169 = scmp.lt.s32.totalorder %s168, 31
          %s170 = scalar_select %p169, %s168, 31
          %s171 = smul.addr %s170, 8
          %s172 = scalar_lea.vmem %s1, %s171
          %s173 = smul.u32 32, %s26
        $region16: #{tpu_custom_call.1} parent=11 // pred_fallthru
          _
        // Predicated region
        $region17: #{tpu_custom_call.1} parent=11 // pred_check
          %p174 = pneg %p103
        $region18: #{tpu_custom_call.1} parent=11 // pred_check_branch
          %176 = sbr.rel (%p174) target = $region20
        $region19: #{tpu_custom_call.1} parent=11 // pred_region
          _
        $region20: #{tpu_custom_call.1} parent=11 // pred_fallthru
          _
        // Predicated region
        $region21: #{tpu_custom_call.1} parent=11 // pred_check
          %p177 = pneg %p124
        $region22: #{tpu_custom_call.1} parent=11 // pred_check_branch
          %179 = sbr.rel (%p177) target = $region24
        $region23: #{tpu_custom_call.1} parent=11 // pred_region
          _
        $region24: #{tpu_custom_call.1} parent=11 // pred_fallthru
          _
      $region12: #{tpu_custom_call.1} parent=5 // pred_fallthru
        _
      %p180 = scmp.lt.s32.totalorder %s16, 4
      // Predicated region
      $region25: #{tpu_custom_call.1} parent=5 // pred_check
        %p181 = pneg %p180
      $region26: #{tpu_custom_call.1} parent=5 // pred_check_branch
        %183 = sbr.rel (%p181) target = $region28
      $region27: #{tpu_custom_call.1} parent=5 // pred_region
        // Predicated region
        $region29: #{tpu_custom_call.1} parent=27 // pred_check
          %p184 = pneg %p50
        $region30: #{tpu_custom_call.1} parent=27 // pred_check_branch
          %186 = sbr.rel (%p184) target = $region32
        $region31: #{tpu_custom_call.1} parent=27 // pred_region
          %s187 = sand.u32 %s40, 1
          %s188 = scalar_lea.sflag [#allocation5], %s187
          %s189 = sand.u32 %s40, 1
          %s190 = smul.addr %s189, 128
          %s191 = scalar_lea.vmem [#allocation4], %s190
          %s192 = smul.u32 2, %s23
          %s193 = smul.u32 2, %s24
          %s195 = ssub.s32 2048, 2048
          %196 = vsyncadd %s188, %s195
          %s197 = smul.addr %s192, 8
          %s198 = sadd.s32 %s193, %s197
          %s199 = smul.addr %s198, 128
          %s200 = scalar_lea.hbm %s0, %s199
          %s201 = sshll.u32 %s191, 4
          %s202 = int_to_ptr.vmem [resolvable:$true] %s201
          %207 = dma.hbm_to_vmem [thread:$0]  %s200, 2048, %s202, %s188, 256, 256, 16
        $region32: #{tpu_custom_call.1} parent=27 // pred_fallthru
          _
      $region28: #{tpu_custom_call.1} parent=5 // pred_fallthru
        _
      %p208 = scmp.le.s32.totalorder 1, %s16
      %p209 = scmp.lt.s32.totalorder %s16, 5
      %p210 = pnand %p208, %p209
      %p211 = pneg %p210
      // Predicated region
      $region33: #{tpu_custom_call.1} parent=5 // pred_check
        _
      $region34: #{tpu_custom_call.1} parent=5 // pred_check_branch
        %213 = sbr.rel (%p210) target = $region36
      $region35: #{tpu_custom_call.1} parent=5 // pred_region
        %s214 = ssub.s32 %s16, 1
        %s215 = sand.u32 %s43, 1
        %s216 = scalar_lea.sflag [#allocation5], %s215
        %s217 = sand.u32 %s43, 1
        %s218 = smul.addr %s217, 128
        %s219 = scalar_lea.vmem [#allocation4], %s218
        // Predicated region
        $region37: #{tpu_custom_call.1} parent=35 // pred_check
          %p220 = pneg %p56
        $region38: #{tpu_custom_call.1} parent=35 // pred_check_branch
          %222 = sbr.rel (%p220) target = $region40
        $region39: #{tpu_custom_call.1} parent=35 // pred_region
          %223 = dma.done %s216, 2048
        $region40: #{tpu_custom_call.1} parent=35 // pred_fallthru
          _
        %s224 = sand.u32 %s43, 1
        %s225 = scalar_lea.sflag [#allocation5], %s224
        %s226 = sand.u32 %s43, 1
        %s227 = smul.addr %s226, 128
        %s228 = scalar_lea.vmem [#allocation4], %s227
        %p229 = pneg %p56
        %p230 = pneg %p53
        %s231 = smul.u32 32, %s26
        %p232 = scmp.lt.s32.totalorder %s231, 31
        %s233 = scalar_select %p232, %s231, 31
        %s234 = smul.addr %s233, 8
        %s235 = scalar_lea.vmem %s1, %s234
        %p236 = pneg %p82
        %p237 = pneg %p79
        %p238 = pneg %p103
        %p239 = pneg %p100
        %p240 = pneg %p124
        %p241 = pneg %p121
        %p242 = pneg %p150
        %p243 = pneg %p147
        %s244 = sand.u32 %s137, 1
        %s245 = scalar_lea.sflag [#allocation6], %s244
        %s246 = sand.u32 %s137, 1
        %s247 = smul.addr %s246, 2
        %s248 = scalar_lea.vmem [#allocation7], %s247
        %s249 = smul.u32 2, %s25
        %s250 = smul.u32 2, %s26
        %s251 = smul.u32 32, %s26
        %p252 = scmp.lt.s32.totalorder %s251, 31
        %s253 = scalar_select %p252, %s251, 31
        %s254 = smul.addr %s253, 8
        %s255 = scalar_lea.vmem %s1, %s254
        %s256 = smul.u32 32, %s26
        %v257 = vld [vmem:[%s219] sm:$0xff]
        %v258 = vld [vmem:[%s219 + $0x8] sm:$0xff]
        %v259 = vld [vmem:[%s219 + $0x10] sm:$0xff]
        %v260 = vld [vmem:[%s219 + $0x18] sm:$0xff]
        %v261 = vld [vmem:[%s219 + $0x20] sm:$0xff]
        %v262 = vld [vmem:[%s219 + $0x28] sm:$0xff]
        %v263 = vld [vmem:[%s219 + $0x30] sm:$0xff]
        %v264 = vld [vmem:[%s219 + $0x38] sm:$0xff]
        %v265 = vld [vmem:[%s219 + $0x40] sm:$0xff]
        %v266 = vld [vmem:[%s219 + $0x48] sm:$0xff]
        %v267 = vld [vmem:[%s219 + $0x50] sm:$0xff]
        %v268 = vld [vmem:[%s219 + $0x58] sm:$0xff]
        %v269 = vld [vmem:[%s219 + $0x60] sm:$0xff]
        %v270 = vld [vmem:[%s219 + $0x68] sm:$0xff]
        %v271 = vld [vmem:[%s219 + $0x70] sm:$0xff]
        %v272 = vld [vmem:[%s219 + $0x78] sm:$0xff]
        %v273 = vld [vmem:[%s255] sm:$0xff]
        %v274 = vld [vmem:[%s255 + $0x8] sm:$0xff]
        %v275 = vld [vmem:[%s255 + $0x10] sm:$0xff]
        %v276 = vld [vmem:[%s255 + $0x18] sm:$0xff]
        %v277 = vld [vmem:[%s255 + $0x20] sm:$0xff]
        %v278 = vld [vmem:[%s255 + $0x28] sm:$0xff]
        %v279 = vld [vmem:[%s255 + $0x30] sm:$0xff]
        %v280 = vld [vmem:[%s255 + $0x38] sm:$0xff]
        %v281 = vld [vmem:[%s255 + $0x40] sm:$0xff]
        %v282 = vld [vmem:[%s255 + $0x48] sm:$0xff]
        %v283 = vld [vmem:[%s255 + $0x50] sm:$0xff]
        %v284 = vld [vmem:[%s255 + $0x58] sm:$0xff]
        %v285 = vld [vmem:[%s255 + $0x60] sm:$0xff]
        %v286 = vld [vmem:[%s255 + $0x68] sm:$0xff]
        %v287 = vld [vmem:[%s255 + $0x70] sm:$0xff]
        %v288 = vld [vmem:[%s255 + $0x78] sm:$0xff]
        %v289 = vld [vmem:[%s255 + $0x80] sm:$0xff]
        %v290 = vld [vmem:[%s255 + $0x88] sm:$0xff]
        %v291 = vld [vmem:[%s255 + $0x90] sm:$0xff]
        %v292 = vld [vmem:[%s255 + $0x98] sm:$0xff]
        %v293 = vld [vmem:[%s255 + $0xa0] sm:$0xff]
        %v294 = vld [vmem:[%s255 + $0xa8] sm:$0xff]
        %v295 = vld [vmem:[%s255 + $0xb0] sm:$0xff]
        %v296 = vld [vmem:[%s255 + $0xb8] sm:$0xff]
        %v297 = vld [vmem:[%s255 + $0xc0] sm:$0xff]
        %v298 = vld [vmem:[%s255 + $0xc8] sm:$0xff]
        %v299 = vld [vmem:[%s255 + $0xd0] sm:$0xff]
        %v300 = vld [vmem:[%s255 + $0xd8] sm:$0xff]
        %v301 = vld [vmem:[%s255 + $0xe0] sm:$0xff]
        %v302 = vld [vmem:[%s255 + $0xe8] sm:$0xff]
        %v303 = vld [vmem:[%s255 + $0xf0] sm:$0xff]
        %v304 = vld [vmem:[%s255 + $0xf8] sm:$0xff]
        %305 = vmatprep.subr.mxu0 0.0
        %306 = vmatpush1.msra.mxu0 %v273
        %307 = vmatprep.subr.mxu0 0.0
        %308 = vmatpush1.msra.mxu0 %v274
        %309 = vmatprep.subr.mxu0 0.0
        %310 = vmatpush1.msra.mxu0 %v275
        %311 = vmatprep.subr.mxu0 0.0
        %312 = vmatpush1.msra.mxu0 %v276
        %313 = vmatprep.subr.mxu0 0.0
        %314 = vmatpush1.msra.mxu0 %v277
        %315 = vmatprep.subr.mxu0 0.0
        %316 = vmatpush1.msra.mxu0 %v278
        %317 = vmatprep.subr.mxu0 0.0
        %318 = vmatpush1.msra.mxu0 %v279
        %319 = vmatprep.subr.mxu0 0.0
        %320 = vmatpush1.msra.mxu0 %v280
        %321 = vmatprep.subr.mxu0 0.0
        %322 = vmatpush1.msra.mxu0 %v281
        %323 = vmatprep.subr.mxu0 0.0
        %324 = vmatpush1.msra.mxu0 %v282
        %325 = vmatprep.subr.mxu0 0.0
        %326 = vmatpush1.msra.mxu0 %v283
        %327 = vmatprep.subr.mxu0 0.0
        %328 = vmatpush1.msra.mxu0 %v284
        %329 = vmatprep.subr.mxu0 0.0
        %330 = vmatpush1.msra.mxu0 %v285
        %331 = vmatprep.subr.mxu0 0.0
        %332 = vmatpush1.msra.mxu0 %v286
        %333 = vmatprep.subr.mxu0 0.0
        %334 = vmatpush1.msra.mxu0 %v287
        %335 = vmatprep.subr.mxu0 0.0
        %336 = vmatpush1.msra.mxu0 %v288
        %337 = vmatprep.subr.mxu0 0.0
        %338 = vmatpush1.msra.mxu0 %v289
        %339 = vmatprep.subr.mxu0 0.0
        %340 = vmatpush1.msra.mxu0 %v290
        %341 = vmatprep.subr.mxu0 0.0
        %342 = vmatpush1.msra.mxu0 %v291
        %343 = vmatprep.subr.mxu0 0.0
        %344 = vmatpush1.msra.mxu0 %v292
        %345 = vmatprep.subr.mxu0 0.0
        %346 = vmatpush1.msra.mxu0 %v293
        %347 = vmatprep.subr.mxu0 0.0
        %348 = vmatpush1.msra.mxu0 %v294
        %349 = vmatprep.subr.mxu0 0.0
        %350 = vmatpush1.msra.mxu0 %v295
        %351 = vmatprep.subr.mxu0 0.0
        %352 = vmatpush1.msra.mxu0 %v296
        %353 = vmatprep.subr.mxu0 0.0
        %354 = vmatpush1.msra.mxu0 %v297
        %355 = vmatprep.subr.mxu0 0.0
        %356 = vmatpush1.msra.mxu0 %v298
        %357 = vmatprep.subr.mxu0 0.0
        %358 = vmatpush1.msra.mxu0 %v299
        %359 = vmatprep.subr.mxu0 0.0
        %360 = vmatpush1.msra.mxu0 %v300
        %361 = vmatprep.subr.mxu0 0.0
        %362 = vmatpush1.msra.mxu0 %v301
        %363 = vmatprep.subr.mxu0 0.0
        %364 = vmatpush1.msra.mxu0 %v302
        %365 = vmatprep.subr.mxu0 0.0
        %366 = vmatpush1.msra.mxu0 %v303
        %367 = vmatprep.subr.mxu0 0.0
        %368 = vmatpush1.msra.mxu0 %v304
        %369 = vmatprep.mubr.f32.mxu0 %v258
        %370 = vmatmul.mubr.f32.gmra.mrb[0].mxu0 %v257
        %v371 = vpop.f32.mrb[0].mxu0
        %v372 = vadd.f32 0.0, %v371
        %v373 = vpop.f32.mrb[0].mxu0
        %374 = vmatprep.mubr.f32.mxu0 %v260
        %375 = vmatmul.mubr.f32.gmra.mrb[0].mxu0 %v259
        %v376 = vpop.f32.mrb[0].mxu0
        %v377 = vadd.f32 0.0, %v376
        %v378 = vpop.f32.mrb[0].mxu0
        %379 = vmatprep.mubr.f32.mxu0 %v262
        %380 = vmatmul.mubr.f32.gmra.mrb[0].mxu0 %v261
        %v381 = vpop.f32.mrb[0].mxu0
        %v382 = vadd.f32 0.0, %v381
        %v383 = vpop.f32.mrb[0].mxu0
        %384 = vmatprep.mubr.f32.mxu0 %v264
        %385 = vmatmul.mubr.f32.gmra.mrb[0].mxu0 %v263
        %v386 = vpop.f32.mrb[0].mxu0
        %v387 = vadd.f32 0.0, %v386
        %v388 = vpop.f32.mrb[0].mxu0
        %389 = vmatprep.mubr.f32.mxu0 %v266
        %390 = vmatmul.mubr.f32.gmra.mrb[0].mxu0 %v265
        %v391 = vpop.f32.mrb[0].mxu0
        %v392 = vadd.f32 0.0, %v391
        %v393 = vpop.f32.mrb[0].mxu0
        %394 = vmatprep.mubr.f32.mxu0 %v268
        %395 = vmatmul.mubr.f32.gmra.mrb[0].mxu0 %v267
        %v396 = vpop.f32.mrb[0].mxu0
        %v397 = vadd.f32 0.0, %v396
        %v398 = vpop.f32.mrb[0].mxu0
        %399 = vmatprep.mubr.f32.mxu0 %v270
        %400 = vmatmul.mubr.f32.gmra.mrb[0].mxu0 %v269
        %v401 = vpop.f32.mrb[0].mxu0
        %v402 = vadd.f32 0.0, %v401
        %v403 = vpop.f32.mrb[0].mxu0
        %404 = vmatprep.mubr.f32.mxu0 %v272
        %405 = vmatmul.mubr.f32.gmra.mrb[0].mxu0 %v271
        %v406 = vpop.f32.mrb[0].mxu0
        %v407 = vadd.f32 0.0, %v406
        %v408 = vpop.f32.mrb[0].mxu0
        %409 = vdwg.mxu0
        %v410 = vmax.f32 %v257, %v258
        %411 = vmax.xlane.f32.xlu0 %v410
        %v412 = vpop.xlane.xlu0 %411
        %v413 = vmax.f32 %v259, %v260
        %414 = vmax.xlane.f32.xlu0 %v413
        %v415 = vpop.xlane.xlu0 %414
        %v416 = vmax.f32 %v261, %v262
        %417 = vmax.xlane.f32.xlu0 %v416
        %v418 = vpop.xlane.xlu0 %417
        %v419 = vmax.f32 %v263, %v264
        %420 = vmax.xlane.f32.xlu0 %v419
        %v421 = vpop.xlane.xlu0 %420
        %v422 = vmax.f32 %v265, %v266
        %423 = vmax.xlane.f32.xlu0 %v422
        %v424 = vpop.xlane.xlu0 %423
        %v425 = vmax.f32 %v267, %v268
        %426 = vmax.xlane.f32.xlu0 %v425
        %v427 = vpop.xlane.xlu0 %426
        %v428 = vmax.f32 %v269, %v270
        %429 = vmax.xlane.f32.xlu0 %v428
        %v430 = vpop.xlane.xlu0 %429
        %v431 = vmax.f32 %v271, %v272
        %432 = vmax.xlane.f32.xlu0 %v431
        %v433 = vpop.xlane.xlu0 %432
        %p434 = scmp.eq.s32.totalorder %s26, 0
        // Predicated region
        $region41: #{tpu_custom_call.1} parent=35 // pred_check
          %p435 = pneg %p434
        $region42: #{tpu_custom_call.1} parent=35 // pred_check_branch
          %437 = sbr.rel (%p435) target = $region44
        $region43: #{tpu_custom_call.1} parent=35 // pred_region
          %vm438 = vcmask 48128
          %439 = vst.msk [vmem:[#allocation2] sm:$0xff] %vm438, %v372
          %440 = vst.msk [vmem:[#allocation2 + $0x8] sm:$0xff] %vm438, %v377
          %441 = vst.msk [vmem:[#allocation2 + $0x10] sm:$0xff] %vm438, %v382
          %442 = vst.msk [vmem:[#allocation2 + $0x18] sm:$0xff] %vm438, %v387
          %443 = vst.msk [vmem:[#allocation2 + $0x20] sm:$0xff] %vm438, %v392
          %444 = vst.msk [vmem:[#allocation2 + $0x28] sm:$0xff] %vm438, %v397
          %445 = vst.msk [vmem:[#allocation2 + $0x30] sm:$0xff] %vm438, %v402
          %446 = vst.msk [vmem:[#allocation2 + $0x38] sm:$0xff] %vm438, %v407
          %vm447 = vcmask 7168
          %448 = vst.msk [vmem:[#allocation3] sm:$0xff] %vm447, %v412
          %449 = vst.msk [vmem:[#allocation3 + $0x8] sm:$0xff] %vm447, %v415
          %450 = vst.msk [vmem:[#allocation3 + $0x10] sm:$0xff] %vm447, %v418
          %451 = vst.msk [vmem:[#allocation3 + $0x18] sm:$0xff] %vm447, %v421
          %452 = vst.msk [vmem:[#allocation3 + $0x20] sm:$0xff] %vm447, %v424
          %453 = vst.msk [vmem:[#allocation3 + $0x28] sm:$0xff] %vm447, %v427
          %454 = vst.msk [vmem:[#allocation3 + $0x30] sm:$0xff] %vm447, %v430
          %455 = vst.msk [vmem:[#allocation3 + $0x38] sm:$0xff] %vm447, %v433
        $region44: #{tpu_custom_call.1} parent=35 // pred_fallthru
          _
        %p456 = scmp.gt.s32.totalorder %s26, 0
        // Predicated region
        $region45: #{tpu_custom_call.1} parent=35 // pred_check
          %p457 = pneg %p456
        $region46: #{tpu_custom_call.1} parent=35 // pred_check_branch
          %459 = sbr.rel (%p457) target = $region48
        $region47: #{tpu_custom_call.1} parent=35 // pred_region
          %v460 = vld [vmem:[#allocation2] sm:$0xff]
          %v461 = vld [vmem:[#allocation2 + $0x8] sm:$0xff]
          %v462 = vld [vmem:[#allocation2 + $0x10] sm:$0xff]
          %v463 = vld [vmem:[#allocation2 + $0x18] sm:$0xff]
          %v464 = vld [vmem:[#allocation2 + $0x20] sm:$0xff]
          %v465 = vld [vmem:[#allocation2 + $0x28] sm:$0xff]
          %v466 = vld [vmem:[#allocation2 + $0x30] sm:$0xff]
          %v467 = vld [vmem:[#allocation2 + $0x38] sm:$0xff]
          %v468 = vadd.f32 %v460, %v372
          %v469 = vadd.f32 %v461, %v377
          %v470 = vadd.f32 %v462, %v382
          %v471 = vadd.f32 %v463, %v387
          %v472 = vadd.f32 %v464, %v392
          %v473 = vadd.f32 %v465, %v397
          %v474 = vadd.f32 %v466, %v402
          %v475 = vadd.f32 %v467, %v407
          %vm476 = vcmask 48128
          %477 = vst.msk [vmem:[#allocation2] sm:$0xff] %vm476, %v468
          %478 = vst.msk [vmem:[#allocation2 + $0x8] sm:$0xff] %vm476, %v469
          %479 = vst.msk [vmem:[#allocation2 + $0x10] sm:$0xff] %vm476, %v470
          %480 = vst.msk [vmem:[#allocation2 + $0x18] sm:$0xff] %vm476, %v471
          %481 = vst.msk [vmem:[#allocation2 + $0x20] sm:$0xff] %vm476, %v472
          %482 = vst.msk [vmem:[#allocation2 + $0x28] sm:$0xff] %vm476, %v473
          %483 = vst.msk [vmem:[#allocation2 + $0x30] sm:$0xff] %vm476, %v474
          %484 = vst.msk [vmem:[#allocation2 + $0x38] sm:$0xff] %vm476, %v475
          %v485 = vld [vmem:[#allocation3] sm:$0xff]
          %v486 = vld [vmem:[#allocation3 + $0x8] sm:$0xff]
          %v487 = vld [vmem:[#allocation3 + $0x10] sm:$0xff]
          %v488 = vld [vmem:[#allocation3 + $0x18] sm:$0xff]
          %v489 = vld [vmem:[#allocation3 + $0x20] sm:$0xff]
          %v490 = vld [vmem:[#allocation3 + $0x28] sm:$0xff]
          %v491 = vld [vmem:[#allocation3 + $0x30] sm:$0xff]
          %v492 = vld [vmem:[#allocation3 + $0x38] sm:$0xff]
          %v493 = vmax.f32 %v485, %v412
          %v494 = vmax.f32 %v486, %v415
          %v495 = vmax.f32 %v487, %v418
          %v496 = vmax.f32 %v488, %v421
          %v497 = vmax.f32 %v489, %v424
          %v498 = vmax.f32 %v490, %v427
          %v499 = vmax.f32 %v491, %v430
          %v500 = vmax.f32 %v492, %v433
          %vm501 = vcmask 7168
          %502 = vst.msk [vmem:[#allocation3] sm:$0xff] %vm501, %v493
          %503 = vst.msk [vmem:[#allocation3 + $0x8] sm:$0xff] %vm501, %v494
          %504 = vst.msk [vmem:[#allocation3 + $0x10] sm:$0xff] %vm501, %v495
          %505 = vst.msk [vmem:[#allocation3 + $0x18] sm:$0xff] %vm501, %v496
          %506 = vst.msk [vmem:[#allocation3 + $0x20] sm:$0xff] %vm501, %v497
          %507 = vst.msk [vmem:[#allocation3 + $0x28] sm:$0xff] %vm501, %v498
          %508 = vst.msk [vmem:[#allocation3 + $0x30] sm:$0xff] %vm501, %v499
          %509 = vst.msk [vmem:[#allocation3 + $0x38] sm:$0xff] %vm501, %v500
        $region48: #{tpu_custom_call.1} parent=35 // pred_fallthru
          _
        // Predicated region
        $region49: #{tpu_custom_call.1} parent=35 // pred_check
          %p510 = pneg %p434
        $region50: #{tpu_custom_call.1} parent=35 // pred_check_branch
          %512 = sbr.rel (%p510) target = $region52
        $region51: #{tpu_custom_call.1} parent=35 // pred_region
          %v513 = vld [vmem:[%s2] sm:$0x3]
          %v514 = vld [vmem:[#allocation2] sm:$0xff]
          %v515 = vld [vmem:[#allocation2 + $0x8] sm:$0xff]
          %v516 = vld [vmem:[#allocation2 + $0x10] sm:$0xff]
          %v517 = vld [vmem:[#allocation2 + $0x18] sm:$0xff]
          %v518 = vld [vmem:[#allocation2 + $0x20] sm:$0xff]
          %v519 = vld [vmem:[#allocation2 + $0x28] sm:$0xff]
          %v520 = vld [vmem:[#allocation2 + $0x30] sm:$0xff]
          %v521 = vld [vmem:[#allocation2 + $0x38] sm:$0xff]
          %v522 = vld [vmem:[#allocation3] sm:$0xff]
          %v523 = vld [vmem:[#allocation3 + $0x8] sm:$0xff]
          %v524 = vld [vmem:[#allocation3 + $0x10] sm:$0xff]
          %v525 = vld [vmem:[#allocation3 + $0x18] sm:$0xff]
          %v526 = vld [vmem:[#allocation3 + $0x20] sm:$0xff]
          %v527 = vld [vmem:[#allocation3 + $0x28] sm:$0xff]
          %v528 = vld [vmem:[#allocation3 + $0x30] sm:$0xff]
          %v529 = vld [vmem:[#allocation3 + $0x38] sm:$0xff]
          %vm530 = vcmask 261120
          %v532 = vsel %vm530, %v513, 0
          %534 = vmatprep.subr.mxu0 0.0
          %535 = vmatpush1.msra.mxu0 %v514
          %536 = vmatprep.subr.mxu0 0.0
          %537 = vmatpush1.msra.mxu0 %v515
          %538 = vmatprep.subr.mxu0 0.0
          %539 = vmatpush1.msra.mxu0 %v516
          %540 = vmatprep.subr.mxu0 0.0
          %541 = vmatpush1.msra.mxu0 %v517
          %542 = vmatprep.subr.mxu0 0.0
          %543 = vmatpush1.msra.mxu0 0.0
          %544 = vmatprep.subr.mxu0 0.0
          %545 = vmatpush1.msra.mxu0 0.0
          %546 = vmatprep.subr.mxu0 0.0
          %547 = vmatpush1.msra.mxu0 0.0
          %548 = vmatprep.subr.mxu0 0.0
          %549 = vmatpush1.msra.mxu0 0.0
          %550 = vmatprep.subr.mxu0 0.0
          %551 = vmatpush1.msra.mxu0 0.0
          %552 = vmatprep.subr.mxu0 0.0
          %553 = vmatpush1.msra.mxu0 0.0
          %554 = vmatprep.subr.mxu0 0.0
          %555 = vmatpush1.msra.mxu0 0.0
          %556 = vmatprep.subr.mxu0 0.0
          %557 = vmatpush1.msra.mxu0 0.0
          %558 = vmatprep.subr.mxu0 0.0
          %559 = vmatpush1.msra.mxu0 0.0
          %560 = vmatprep.subr.mxu0 0.0
          %561 = vmatpush1.msra.mxu0 0.0
          %562 = vmatprep.subr.mxu0 0.0
          %563 = vmatpush1.msra.mxu0 0.0
          %564 = vmatprep.subr.mxu0 0.0
          %565 = vmatpush1.msra.mxu0 0.0
          %566 = vmatprep.subr.mxu0 0.0
          %567 = vmatpush1.msra.mxu0 0.0
          %568 = vmatprep.subr.mxu0 0.0
          %569 = vmatpush1.msra.mxu0 0.0
          %570 = vmatprep.subr.mxu0 0.0
          %571 = vmatpush1.msra.mxu0 0.0
          %572 = vmatprep.subr.mxu0 0.0
          %573 = vmatpush1.msra.mxu0 0.0
          %574 = vmatprep.subr.mxu0 0.0
          %575 = vmatpush1.msra.mxu0 0.0
          %576 = vmatprep.subr.mxu0 0.0
          %577 = vmatpush1.msra.mxu0 0.0
          %578 = vmatprep.subr.mxu0 0.0
          %579 = vmatpush1.msra.mxu0 0.0
          %580 = vmatprep.subr.mxu0 0.0
          %581 = vmatpush1.msra.mxu0 0.0
          %582 = vmatprep.subr.mxu0 0.0
          %583 = vmatpush1.msra.mxu0 0.0
          %584 = vmatprep.subr.mxu0 0.0
          %585 = vmatpush1.msra.mxu0 0.0
          %586 = vmatprep.subr.mxu0 0.0
          %587 = vmatpush1.msra.mxu0 0.0
          %588 = vmatprep.subr.mxu0 0.0
          %589 = vmatpush1.msra.mxu0 0.0
          %590 = vmatprep.subr.mxu0 0.0
          %591 = vmatpush1.msra.mxu0 0.0
          %592 = vmatprep.subr.mxu0 0.0
          %593 = vmatpush1.msra.mxu0 0.0
          %594 = vmatprep.subr.mxu0 0.0
          %595 = vmatpush1.msra.mxu0 0.0
          %596 = vmatprep.subr.mxu0 0.0
          %597 = vmatpush1.msra.mxu0 0.0
          %598 = vmatprep.mubr.f32.mxu0 0.0
          %599 = vmatmul.mubr.f32.gmra.mrb[0].mxu0 %v532
          %v600 = vpop.f32.mrb[0].mxu0
          %v601 = vadd.f32 0.0, %v600
          %v602 = vpop.f32.mrb[0].mxu0
          %603 = vdwg.mxu0
          %604 = vmatprep.subr.mxu0 0.0
          %605 = vmatpush1.msra.mxu0 %v518
          %606 = vmatprep.subr.mxu0 0.0
          %607 = vmatpush1.msra.mxu0 %v519
          %608 = vmatprep.subr.mxu0 0.0
          %609 = vmatpush1.msra.mxu0 %v520
          %610 = vmatprep.subr.mxu0 0.0
          %611 = vmatpush1.msra.mxu0 %v521
          %612 = vmatprep.subr.mxu0 0.0
          %613 = vmatpush1.msra.mxu0 0.0
          %614 = vmatprep.subr.mxu0 0.0
          %615 = vmatpush1.msra.mxu0 0.0
          %616 = vmatprep.subr.mxu0 0.0
          %617 = vmatpush1.msra.mxu0 0.0
          %618 = vmatprep.subr.mxu0 0.0
          %619 = vmatpush1.msra.mxu0 0.0
          %620 = vmatprep.subr.mxu0 0.0
          %621 = vmatpush1.msra.mxu0 0.0
          %622 = vmatprep.subr.mxu0 0.0
          %623 = vmatpush1.msra.mxu0 0.0
          %624 = vmatprep.subr.mxu0 0.0
          %625 = vmatpush1.msra.mxu0 0.0
          %626 = vmatprep.subr.mxu0 0.0
          %627 = vmatpush1.msra.mxu0 0.0
          %628 = vmatprep.subr.mxu0 0.0
          %629 = vmatpush1.msra.mxu0 0.0
          %630 = vmatprep.subr.mxu0 0.0
          %631 = vmatpush1.msra.mxu0 0.0
          %632 = vmatprep.subr.mxu0 0.0
          %633 = vmatpush1.msra.mxu0 0.0
          %634 = vmatprep.subr.mxu0 0.0
          %635 = vmatpush1.msra.mxu0 0.0
          %636 = vmatprep.subr.mxu0 0.0
          %637 = vmatpush1.msra.mxu0 0.0
          %638 = vmatprep.subr.mxu0 0.0
          %639 = vmatpush1.msra.mxu0 0.0
          %640 = vmatprep.subr.mxu0 0.0
          %641 = vmatpush1.msra.mxu0 0.0
          %642 = vmatprep.subr.mxu0 0.0
          %643 = vmatpush1.msra.mxu0 0.0
          %644 = vmatprep.subr.mxu0 0.0
          %645 = vmatpush1.msra.mxu0 0.0
          %646 = vmatprep.subr.mxu0 0.0
          %647 = vmatpush1.msra.mxu0 0.0
          %648 = vmatprep.subr.mxu0 0.0
          %649 = vmatpush1.msra.mxu0 0.0
          %650 = vmatprep.subr.mxu0 0.0
          %651 = vmatpush1.msra.mxu0 0.0
          %652 = vmatprep.subr.mxu0 0.0
          %653 = vmatpush1.msra.mxu0 0.0
          %654 = vmatprep.subr.mxu0 0.0
          %655 = vmatpush1.msra.mxu0 0.0
          %656 = vmatprep.subr.mxu0 0.0
          %657 = vmatpush1.msra.mxu0 0.0
          %658 = vmatprep.subr.mxu0 0.0
          %659 = vmatpush1.msra.mxu0 0.0
          %660 = vmatprep.subr.mxu0 0.0
          %661 = vmatpush1.msra.mxu0 0.0
          %662 = vmatprep.subr.mxu0 0.0
          %663 = vmatpush1.msra.mxu0 0.0
          %664 = vmatprep.subr.mxu0 0.0
          %665 = vmatpush1.msra.mxu0 0.0
          %666 = vmatprep.subr.mxu0 0.0
          %667 = vmatpush1.msra.mxu0 0.0
          %668 = vmatprep.mubr.f32.mxu0 0.0
          %669 = vmatmul.mubr.f32.gmra.mrb[0].mxu0 %v532
          %v670 = vpop.f32.mrb[0].mxu0
          %v671 = vadd.f32 0.0, %v670
          %v672 = vpop.f32.mrb[0].mxu0
          %673 = vdwg.mxu0
          %v674 = vmax.f32 %v601, 0.0
          %v675 = vmax.f32 %v671, 0.0
          %vm676 = vcmask 41984
          %v677 = vsel %vm676, %v674, 0.0
          %678 = vadd.xlane.f32.xlu0 %v677
          %v679 = vpop.xlane.xlu0 %678
          %v680 = vsel %vm676, %v675, 0.0
          %681 = vadd.xlane.f32.xlu0 %v680
          %v682 = vpop.xlane.xlu0 %681
          %691 = vset.pattern.permute.xlu0 0
          %692 = vperm.xlu0 %691, %v522
          %v693 = vpop.permute.xlu0 %692
          %694 = vset.pattern.permute.xlu0 0
          %695 = vperm.xlu0 %694, %v523
          %v696 = vpop.permute.xlu0 %695
          %697 = vset.pattern.permute.xlu0 0
          %698 = vperm.xlu0 %697, %v524
          %v699 = vpop.permute.xlu0 %698
          %700 = vset.pattern.permute.xlu0 0
          %701 = vperm.xlu0 %700, %v525
          %v702 = vpop.permute.xlu0 %701
          %703 = vset.pattern.permute.xlu0 0
          %704 = vperm.xlu0 %703, %v526
          %v705 = vpop.permute.xlu0 %704
          %706 = vset.pattern.permute.xlu0 0
          %707 = vperm.xlu0 %706, %v527
          %v708 = vpop.permute.xlu0 %707
          %709 = vset.pattern.permute.xlu0 0
          %710 = vperm.xlu0 %709, %v528
          %v711 = vpop.permute.xlu0 %710
          %712 = vset.pattern.permute.xlu0 0
          %713 = vperm.xlu0 %712, %v529
          %v714 = vpop.permute.xlu0 %713
          %v715 = vlaneseq
          %v716 = vand.u32 %v715, 127
          %v717 = vlaneseq
          %v718 = vshrl.u32 %v717, 7
          %v719 = vsub.s32 %v716, %v718
          %v720 = vrot.slane %v693, %v719
          %v721 = vadd.s32 %v716, 4294967288
          %v722 = vlaneseq
          %v723 = vshrl.u32 %v722, 7
          %v724 = vsub.s32 %v721, %v723
          %v725 = vrot.slane %v696, %v724
          %vm726 = vcmask 130112
          %v727 = vsel %vm726, %v725, %v720
          %v728 = vadd.s32 %v716, 4294967280
          %v729 = vlaneseq
          %v730 = vshrl.u32 %v729, 7
          %v731 = vsub.s32 %v728, %v730
          %v732 = vrot.slane %v699, %v731
          %vm733 = vcmask 195712
          %v734 = vsel %vm733, %v732, %v727
          %v735 = vadd.s32 %v716, 4294967272
          %v736 = vlaneseq
          %v737 = vshrl.u32 %v736, 7
          %v738 = vsub.s32 %v735, %v737
          %v739 = vrot.slane %v702, %v738
          %vm740 = vcmask 261312
          %v741 = vsel %vm740, %v739, %v734
          %v742 = vlaneseq
          %v743 = vshrl.u32 %v742, 7
          %v744 = vsub.s32 %v716, %v743
          %v745 = vrot.slane %v705, %v744
          %v746 = vlaneseq
          %v747 = vshrl.u32 %v746, 7
          %v748 = vsub.s32 %v721, %v747
          %v749 = vrot.slane %v708, %v748
          %v750 = vsel %vm726, %v749, %v745
          %v751 = vlaneseq
          %v752 = vshrl.u32 %v751, 7
          %v753 = vsub.s32 %v728, %v752
          %v754 = vrot.slane %v711, %v753
          %v755 = vsel %vm733, %v754, %v750
          %v756 = vlaneseq
          %v757 = vshrl.u32 %v756, 7
          %v758 = vsub.s32 %v735, %v757
          %v759 = vrot.slane %v714, %v758
          %v760 = vsel %vm740, %v759, %v755
          %vm761 = vcmask 1041409
          %v762 = vsel %vm761, %v760, %v741
          %v763 = vsel %vm530, %v762, 0
          %765 = vmatprep.subr.mxu0 0.0
          %766 = vmatpush1.xpose.msra.mxu0 %v532
          %767 = vmatprep.subr.mxu0 0.0
          %768 = vmatpush1.xpose.msra.mxu0 0.0
          %769 = vmatprep.subr.mxu0 0.0
          %770 = vmatpush1.xpose.msra.mxu0 0.0
          %771 = vmatprep.subr.mxu0 0.0
          %772 = vmatpush1.xpose.msra.mxu0 0.0
          %773 = vmatprep.subr.mxu0 0.0
          %774 = vmatpush1.xpose.msra.mxu0 0.0
          %775 = vmatprep.subr.mxu0 0.0
          %776 = vmatpush1.xpose.msra.mxu0 0.0
          %777 = vmatprep.subr.mxu0 0.0
          %778 = vmatpush1.xpose.msra.mxu0 0.0
          %779 = vmatprep.subr.mxu0 0.0
          %780 = vmatpush1.xpose.msra.mxu0 0.0
          %781 = vmatprep.subr.mxu0 0.0
          %782 = vmatpush1.xpose.msra.mxu0 0.0
          %783 = vmatprep.subr.mxu0 0.0
          %784 = vmatpush1.xpose.msra.mxu0 0.0
          %785 = vmatprep.subr.mxu0 0.0
          %786 = vmatpush1.xpose.msra.mxu0 0.0
          %787 = vmatprep.subr.mxu0 0.0
          %788 = vmatpush1.xpose.msra.mxu0 0.0
          %789 = vmatprep.subr.mxu0 0.0
          %790 = vmatpush1.xpose.msra.mxu0 0.0
          %791 = vmatprep.subr.mxu0 0.0
          %792 = vmatpush1.xpose.msra.mxu0 0.0
          %793 = vmatprep.subr.mxu0 0.0
          %794 = vmatpush1.xpose.msra.mxu0 0.0
          %795 = vmatprep.subr.mxu0 0.0
          %796 = vmatpush1.xpose.msra.mxu0 0.0
          %797 = vmatprep.subr.mxu0 0.0
          %798 = vmatpush1.xpose.msra.mxu0 0.0
          %799 = vmatprep.subr.mxu0 0.0
          %800 = vmatpush1.xpose.msra.mxu0 0.0
          %801 = vmatprep.subr.mxu0 0.0
          %802 = vmatpush1.xpose.msra.mxu0 0.0
          %803 = vmatprep.subr.mxu0 0.0
          %804 = vmatpush1.xpose.msra.mxu0 0.0
          %805 = vmatprep.subr.mxu0 0.0
          %806 = vmatpush1.xpose.msra.mxu0 0.0
          %807 = vmatprep.subr.mxu0 0.0
          %808 = vmatpush1.xpose.msra.mxu0 0.0
          %809 = vmatprep.subr.mxu0 0.0
          %810 = vmatpush1.xpose.msra.mxu0 0.0
          %811 = vmatprep.subr.mxu0 0.0
          %812 = vmatpush1.xpose.msra.mxu0 0.0
          %813 = vmatprep.subr.mxu0 0.0
          %814 = vmatpush1.xpose.msra.mxu0 0.0
          %815 = vmatprep.subr.mxu0 0.0
          %816 = vmatpush1.xpose.msra.mxu0 0.0
          %817 = vmatprep.subr.mxu0 0.0
          %818 = vmatpush1.xpose.msra.mxu0 0.0
          %819 = vmatprep.subr.mxu0 0.0
          %820 = vmatpush1.xpose.msra.mxu0 0.0
          %821 = vmatprep.subr.mxu0 0.0
          %822 = vmatpush1.xpose.msra.mxu0 0.0
          %823 = vmatprep.subr.mxu0 0.0
          %824 = vmatpush1.xpose.msra.mxu0 0.0
          %825 = vmatprep.subr.mxu0 0.0
          %826 = vmatpush1.xpose.msra.mxu0 0.0
          %827 = vmatprep.subr.mxu0 0.0
          %828 = vmatpush1.xpose.msra.mxu0 0.0
          %829 = vmatprep.mubr.f32.mxu0 0.0
          %830 = vmatmul.mubr.f32.gmra.mrb[0].mxu0 %v763
          %v831 = vpop.f32.mrb[0].mxu0
          %v832 = vadd.f32 0.0, %v831
          %v833 = vpop.f32.mrb[0].mxu0
          %834 = vdwg.mxu0
          %v835 = vmax.f32 %v832, 0.0
          %v837 = vlaneseq
          %v838 = vshrl.u32 %v837, 7
          %v839 = vsub.s32 0, %v838
          %v840 = vrot.slane %v835, %v839
          %842 = vbcast.lane.b32.xlu0 %v840, 256
          %v843 = vpop.permute.xlu0 %842
          %v844 = vlaneseq
          %v845 = vshrl.u32 %v844, 7
          %v846 = vsub.s32 1, %v845
          %v847 = vrot.slane %v835, %v846
          %849 = vbcast.lane.b32.xlu0 %v847, 256
          %v850 = vpop.permute.xlu0 %849
          %v853 = vadd.f32 %v679, %v843
          %v854 = vadd.f32 %v682, %v850
          %v855 = vld [vmem:[%s3] sm:$0x3]
          %858 = vset.pattern.permute.xlu0 0
          %859 = vperm.xlu0 %858, %v853
          %v860 = vpop.permute.xlu0 %859
          %861 = vset.pattern.permute.xlu0 0
          %862 = vperm.xlu0 %861, %v854
          %v863 = vpop.permute.xlu0 %862
          %v864 = vlaneseq
          %v865 = vshrl.u32 %v864, 7
          %v866 = vsub.s32 %v716, %v865
          %v867 = vrot.slane %v860, %v866
          %v868 = vlaneseq
          %v869 = vshrl.u32 %v868, 7
          %v870 = vsub.s32 %v716, %v869
          %v871 = vrot.slane %v863, %v870
          %v872 = vsel %vm761, %v871, %v867
          %vm873 = vcmask 15360
          %v874 = vsel %vm873, %v872, 0
          %vm876 = vcmask 1041408
          %v878 = vsel %vm876, %v855, 0
          %880 = vmatprep.subr.mxu0 0.0
          %881 = vmatpush1.msra.mxu0 %v878
          %882 = vmatprep.subr.mxu0 0.0
          %883 = vmatpush1.msra.mxu0 0.0
          %884 = vmatprep.subr.mxu0 0.0
          %885 = vmatpush1.msra.mxu0 0.0
          %886 = vmatprep.subr.mxu0 0.0
          %887 = vmatpush1.msra.mxu0 0.0
          %888 = vmatprep.subr.mxu0 0.0
          %889 = vmatpush1.msra.mxu0 0.0
          %890 = vmatprep.subr.mxu0 0.0
          %891 = vmatpush1.msra.mxu0 0.0
          %892 = vmatprep.subr.mxu0 0.0
          %893 = vmatpush1.msra.mxu0 0.0
          %894 = vmatprep.subr.mxu0 0.0
          %895 = vmatpush1.msra.mxu0 0.0
          %896 = vmatprep.subr.mxu0 0.0
          %897 = vmatpush1.msra.mxu0 0.0
          %898 = vmatprep.subr.mxu0 0.0
          %899 = vmatpush1.msra.mxu0 0.0
          %900 = vmatprep.subr.mxu0 0.0
          %901 = vmatpush1.msra.mxu0 0.0
          %902 = vmatprep.subr.mxu0 0.0
          %903 = vmatpush1.msra.mxu0 0.0
          %904 = vmatprep.subr.mxu0 0.0
          %905 = vmatpush1.msra.mxu0 0.0
          %906 = vmatprep.subr.mxu0 0.0
          %907 = vmatpush1.msra.mxu0 0.0
          %908 = vmatprep.subr.mxu0 0.0
          %909 = vmatpush1.msra.mxu0 0.0
          %910 = vmatprep.subr.mxu0 0.0
          %911 = vmatpush1.msra.mxu0 0.0
          %912 = vmatprep.subr.mxu0 0.0
          %913 = vmatpush1.msra.mxu0 0.0
          %914 = vmatprep.subr.mxu0 0.0
          %915 = vmatpush1.msra.mxu0 0.0
          %916 = vmatprep.subr.mxu0 0.0
          %917 = vmatpush1.msra.mxu0 0.0
          %918 = vmatprep.subr.mxu0 0.0
          %919 = vmatpush1.msra.mxu0 0.0
          %920 = vmatprep.subr.mxu0 0.0
          %921 = vmatpush1.msra.mxu0 0.0
          %922 = vmatprep.subr.mxu0 0.0
          %923 = vmatpush1.msra.mxu0 0.0
          %924 = vmatprep.subr.mxu0 0.0
          %925 = vmatpush1.msra.mxu0 0.0
          %926 = vmatprep.subr.mxu0 0.0
          %927 = vmatpush1.msra.mxu0 0.0
          %928 = vmatprep.subr.mxu0 0.0
          %929 = vmatpush1.msra.mxu0 0.0
          %930 = vmatprep.subr.mxu0 0.0
          %931 = vmatpush1.msra.mxu0 0.0
          %932 = vmatprep.subr.mxu0 0.0
          %933 = vmatpush1.msra.mxu0 0.0
          %934 = vmatprep.subr.mxu0 0.0
          %935 = vmatpush1.msra.mxu0 0.0
          %936 = vmatprep.subr.mxu0 0.0
          %937 = vmatpush1.msra.mxu0 0.0
          %938 = vmatprep.subr.mxu0 0.0
          %939 = vmatpush1.msra.mxu0 0.0
          %940 = vmatprep.subr.mxu0 0.0
          %941 = vmatpush1.msra.mxu0 0.0
          %942 = vmatprep.subr.mxu0 0.0
          %943 = vmatpush1.msra.mxu0 0.0
          %944 = vmatprep.mubr.f32.mxu0 0.0
          %945 = vmatmul.mubr.f32.gmra.mrb[0].mxu0 %v874
          %v946 = vpop.f32.mrb[0].mxu0
          %v947 = vadd.f32 0.0, %v946
          %v948 = vpop.f32.mrb[0].mxu0
          %949 = vdwg.mxu0
          %v950 = vxor.u32 %v947, 2147483648
          %v951 = vmul.f32 %v950, 1.442695
          %v952 = vpow.pop %v951
          %v953 = vadd.f32 %v952, 1.0
          %v954 = vrcp.pop %v953
          %v955 = vmul.f32 1.0, %v954
          %vm956 = vcmask 254976
          %957 = vst.msk [vmem:[%s248] sm:$0x3] %vm956, %v955
        $region52: #{tpu_custom_call.1} parent=35 // pred_fallthru
          _
        %s958 = sand.u32 %s137, 1
        %s959 = scalar_lea.sflag [#allocation6], %s958
        %s960 = sand.u32 %s137, 1
        %s961 = smul.addr %s960, 2
        %s962 = scalar_lea.vmem [#allocation7], %s961
        // Predicated region
        $region53: #{tpu_custom_call.1} parent=35 // pred_check
          %p963 = pneg %p147
        $region54: #{tpu_custom_call.1} parent=35 // pred_check_branch
          %965 = sbr.rel (%p963) target = $region56
        $region55: #{tpu_custom_call.1} parent=35 // pred_region
          %s967 = ssub.s32 32, 32
          %968 = vsyncadd %s959, %s967
          %s969 = smul.addr %s25, 32
          %s970 = scalar_lea.hbm %s4, %s969
          %s972 = sshll.u32 %s962, 4
          %s973 = int_to_ptr.vmem [resolvable:$true] %s972
          %975 = dma.vmem_to_hbm [thread:$0]  %s973, 32, %s970, %s959
        $region56: #{tpu_custom_call.1} parent=35 // pred_fallthru
          _
      $region36: #{tpu_custom_call.1} parent=5 // pred_fallthru
        _
      %p976 = scmp.le.s32.totalorder 2, %s16
      // Predicated region
      $region57: #{tpu_custom_call.1} parent=5 // pred_check
        %p977 = pneg %p976
      $region58: #{tpu_custom_call.1} parent=5 // pred_check_branch
        %979 = sbr.rel (%p977) target = $region60
      $region59: #{tpu_custom_call.1} parent=5 // pred_region
        %s980 = ssub.s32 %s16, 2
        // Predicated region
        $region61: #{tpu_custom_call.1} parent=59 // pred_check
          %p981 = pneg %p153
        $region62: #{tpu_custom_call.1} parent=59 // pred_check_branch
          %983 = sbr.rel (%p981) target = $region64
        $region63: #{tpu_custom_call.1} parent=59 // pred_region
          %s984 = sand.u32 %s138, 1
          %s985 = scalar_lea.sflag [#allocation6], %s984
          %s986 = sand.u32 %s138, 1
          %s987 = smul.addr %s986, 2
          %s988 = scalar_lea.vmem [#allocation7], %s987
          %989 = dma.done %s985, 32
        $region64: #{tpu_custom_call.1} parent=59 // pred_fallthru
          _
      $region60: #{tpu_custom_call.1} parent=5 // pred_fallthru
        _
    $region6: #{tpu_custom_call.1} parent=1 // loop_footer
      %s20 = sadd.s32 1, %s16
    $region7: #{tpu_custom_call.1} parent=1 // loop_footer_branch
      %15 = sbr.rel target = $region3
    $region8: #{tpu_custom_call.1} parent=1 // loop_exit
      _
    %990 = vsyncpa [#allocation5], 1
    %s991 = scalar_lea.sflag [#allocation5], 1
    %992 = vsyncpa %s991, 1
    %993 = vsyncpa [#allocation6], 1
    %s994 = scalar_lea.sflag [#allocation6], 1
    %995 = vsyncpa %s994, 1

</llo_original>
